<compile_context>
chip_gen: v6e
topology: v6e:2x2x1
jax: 0.10.0
libtpu: 0.0.40
codegen_flags: <defaults>
</compile_context>

<pallas_src>
import jax
import jax.numpy as jnp
from jax.experimental import pallas as pl
from jax.experimental.pallas import tpu as pltpu


def _f1_kernel(cm_ref, out_ref):
    # cm_ref: SMEM (4,) raw counts -> [tn, fp, fn, tp]. Pure scalar-unit math;
    # dtype conversion happens here (scalar converts) instead of a separate XLA op.
    fp = cm_ref[1].astype(jnp.float32)
    fn = cm_ref[2].astype(jnp.float32)
    tp = cm_ref[3].astype(jnp.float32)

    fp_tp = fp + tp
    fn_tp = fn + tp
    cond = jnp.logical_and(fp_tp > 0.0, fn_tp > 0.0)

    # Single divide (algebraically equal to 2*p*r/(p+r) for tp>0); reinject the
    # reference's 0/0 == NaN behavior for tp == 0 with positive denominators.
    f1 = (2.0 * tp) / (fp_tp + fn_tp)
    f1 = jnp.where(tp == 0.0, jnp.float32(jnp.nan), f1)

    out_ref[0] = jnp.where(cond, f1, jnp.float32(0.0))


def bi_cls_f1(confusion_matrix: jax.Array) -> jax.Array:
    """confusion_matrix: (2, 2) [[tn, fp], [fn, tp]] (or flat (4,)), any numeric dtype
    -> (1,) float32 F1."""
    # Only a ravel on the wrapper side; dtype cast is done inside the kernel.
    cm_flat = jnp.ravel(jnp.asarray(confusion_matrix))

    return pl.pallas_call(
        _f1_kernel,
        out_shape=jax.ShapeDtypeStruct((1,), jnp.float32),
        in_specs=[pl.BlockSpec(memory_space=pltpu.MemorySpace.SMEM)],
        out_specs=pl.BlockSpec(memory_space=pltpu.MemorySpace.SMEM),
        cost_estimate=pl.CostEstimate(flops=10, transcendentals=0, bytes_accessed=20),
    )(cm_flat)


def _reference_f1(cm):
    tn, fp, fn, tp = [float(x) for x in jnp.ravel(cm)]
    if fp + tp > 0 and fn + tp > 0:
        precision, recall = tp / (fp + tp), tp / (fn + tp)
        return 2 * precision * recall / (precision + recall)
    return 0.0


if __name__ == "__main__":
    key = jax.random.PRNGKey(0)
    # Deterministic small confusion matrix of raw integer counts: [[tn, fp], [fn, tp]]
    cm = jax.random.randint(key, (2, 2), minval=1, maxval=50)  # int32, cast in-kernel

    out = bi_cls_f1(cm)
    jax.block_until_ready(out)

    ref = _reference_f1(cm)
    assert abs(float(out[0]) - ref) < 1e-5, (float(out[0]), ref)

    # Zero-denominator branch (fp+tp == 0 and fn+tp == 0) -> 0.0
    cm_zero = jnp.array([[10, 0], [0, 0]], dtype=jnp.int32)
    out_zero = bi_cls_f1(cm_zero)
    jax.block_until_ready(out_zero)
    assert float(out_zero[0]) == 0.0

    # tp == 0 but fp+tp > 0 and fn+tp > 0 -> reference computes 0/0 = NaN; preserved.
    cm_nan = jnp.array([[5.0, 3.0], [2.0, 0.0]], dtype=jnp.float32)
    out_nan = bi_cls_f1(cm_nan)
    jax.block_until_ready(out_nan)
    assert bool(jnp.isnan(out_nan[0]))

    print("KERNEL_OK")
</pallas_src>

<mosaic_0001>
module attributes {stable_mosaic.version = 11 : i64} {
  func.func @_f1_kernel(%arg0: memref<4xi32, #tpu.memory_space<smem>>, %arg1: memref<1xf32, #tpu.memory_space<smem>>) attributes {dimension_semantics = [], scalar_prefetch = 0 : i64, scratch_operands = 0 : i64, tpu.core_type = #tpu.core_type<tc>} {
    %c1 = arith.constant 1 : index
    %0 = memref.load %arg0[%c1] : memref<4xi32, #tpu.memory_space<smem>>
    %1 = arith.sitofp %0 : i32 to f32
    %c2 = arith.constant 2 : index
    %2 = memref.load %arg0[%c2] : memref<4xi32, #tpu.memory_space<smem>>
    %3 = arith.sitofp %2 : i32 to f32
    %c3 = arith.constant 3 : index
    %4 = memref.load %arg0[%c3] : memref<4xi32, #tpu.memory_space<smem>>
    %5 = arith.sitofp %4 : i32 to f32
    %6 = arith.addf %1, %5 : f32
    %7 = arith.addf %3, %5 : f32
    %cst = arith.constant 0.000000e+00 : f32
    %8 = arith.cmpf ogt, %6, %cst : f32
    %cst_0 = arith.constant 0.000000e+00 : f32
    %9 = arith.cmpf ogt, %7, %cst_0 : f32
    %10 = arith.andi %8, %9 : i1
    %cst_1 = arith.constant 2.000000e+00 : f32
    %11 = arith.mulf %cst_1, %5 : f32
    %12 = arith.addf %6, %7 : f32
    %13 = arith.divf %11, %12 : f32
    %cst_2 = arith.constant 0.000000e+00 : f32
    %14 = arith.cmpf oeq, %5, %cst_2 : f32
    %cst_3 = arith.constant 0x7FC00000 : f32
    %15 = arith.select %14, %cst_3, %13 : f32
    %cst_4 = arith.constant 0.000000e+00 : f32
    %16 = arith.select %10, %15, %cst_4 : f32
    %c0 = arith.constant 0 : index
    %17 = memref.load %arg1[%c0] : memref<1xf32, #tpu.memory_space<smem>>
    memref.store %16, %arg1[%c0] : memref<1xf32, #tpu.memory_space<smem>>
    return
  }
}

</mosaic_0001>

<llo_original>
// kernel: tpu_custom_call.1
$region0: #{tpu_custom_call.1}
  #allocation0 [shape = 'u32[]', space=smem, size = 0x4, offset = 0x4, fixed_abs, tag = 'smem constant byte address 0x4 - core index']
  #allocation1 [shape = 'u32[144,128]{1,0:T(1,128)}', space=vmem, size = 0x12000, scoped, tag = 'internal scratch']
  %s0 = inlined_call_operand.hbm [shape: s32[4], index: 0, kind: input, shape index: {}]
  %s1 = inlined_call_operand.hbm [shape: f32[1], index: 1, kind: output, shape index: {}]
  %s2 = sld [smem:[#allocation0]]
  $region18: #{tpu_custom_call.1} parent=0
    _
  %s4 = ssub.s32 1, %s2
  %s5 = scalar_select 0, %s4, %s2
  $region1: #{tpu_custom_call.1} parent=0
    #allocation2 [shape = 'u8[512]{0}', space=smem, size = 0x200, scoped, tag = 'input window, operand 0, single buffered']
    #allocation3 [shape = 's32[1]{0}', space=sflag, size = 0x4, scoped, tag = 'scoped memory for tpu_custom_call.1']
    #allocation4 [shape = 's32[1]{0}', space=sflag, size = 0x4, scoped, tag = 'scoped memory for tpu_custom_call.1']
    #allocation5 [shape = 'u8[512]{0}', space=smem, size = 0x200, scoped, tag = 'output window, operand 0, single buffered']
    %6 = vsyncpa [#allocation3], 0
    %7 = vsyncpa [#allocation4], 0
    // Predicated region
    $region2: #{tpu_custom_call.1} parent=1 // pred_check
      _
    $region3: #{tpu_custom_call.1} parent=1 // pred_check_branch
      %9 = sbr.rel (0) target = $region5
    $region4: #{tpu_custom_call.1} parent=1 // pred_region
      %s11 = ssub.s32 16, 16
      %12 = vsyncadd [#allocation3], %s11
      %15 = dma.hbm_to_smem %s0, 16, [#allocation2], [#allocation3]
    $region5: #{tpu_custom_call.1} parent=1 // pred_fallthru
      _
    // Predicated region
    $region6: #{tpu_custom_call.1} parent=1 // pred_check
      _
    $region7: #{tpu_custom_call.1} parent=1 // pred_check_branch
      %17 = sbr.rel (0) target = $region9
    $region8: #{tpu_custom_call.1} parent=1 // pred_region
      %18 = dma.done [#allocation3], 16
    $region9: #{tpu_custom_call.1} parent=1 // pred_fallthru
      _
    %19 = sfence
    %s20 = sld [smem:[#allocation2 + $0x1]]
    %s21 = scvt.s32.f32 %s20
    %s22 = sld [smem:[#allocation2 + $0x2]]
    %s23 = scvt.s32.f32 %s22
    %s24 = sld [smem:[#allocation2 + $0x3]]
    %s25 = scvt.s32.f32 %s24
    %s26 = sadd.f32 %s21, %s25
    %s27 = sadd.f32 %s23, %s25
    %p28 = scmp.gt.f32.partialorder %s26, 0.0
    %p29 = scmp.gt.f32.partialorder %s27, 0.0
    %p30 = pnand %p28, %p29
    %p31 = pneg %p30
    %s32 = smul.f32 %s25, 2.0
    %s33 = sadd.f32 %s26, %s27
    %v34 = vstv %s33
    %v35 = vrcp.pop %v34
    %s36 = vtos %v35
    %s37 = smul.f32 %s32, %s36
    %p38 = scmp.eq.s32.totalorder %s24, 0
    %s39 = scalar_select %p38, nan, %s37
    %s40 = scalar_select %p31, %s39, 0.0
    %s41 = scalar_lea.smem [#allocation5], 0
    %42 = sst [smem:[%s41]] %s40
    // Predicated region
    $region10: #{tpu_custom_call.1} parent=1 // pred_check
      _
    $region11: #{tpu_custom_call.1} parent=1 // pred_check_branch
      %44 = sbr.rel (0) target = $region13
    $region12: #{tpu_custom_call.1} parent=1 // pred_region
      %s46 = ssub.s32 16, 16
      %47 = vsyncadd [#allocation4], %s46
      %50 = dma.smem_to_hbm [#allocation5], 16, %s1, [#allocation4]
    $region13: #{tpu_custom_call.1} parent=1 // pred_fallthru
      _
    // Predicated region
    $region14: #{tpu_custom_call.1} parent=1 // pred_check
      _
    $region15: #{tpu_custom_call.1} parent=1 // pred_check_branch
      %52 = sbr.rel (0) target = $region17
    $region16: #{tpu_custom_call.1} parent=1 // pred_region
      %53 = dma.done [#allocation4], 16
    $region17: #{tpu_custom_call.1} parent=1 // pred_fallthru
      _
    %54 = sfence
    %55 = vsyncpa [#allocation3], 1
    %56 = vsyncpa [#allocation4], 1

</llo_original>
